<compile_context>
chip_gen: v7x
topology: tpu7x:2x2x1
jax: 0.10.0
libtpu: 0.0.40
codegen_flags: <defaults>
</compile_context>

<pallas_src>
import functools
import math

import jax
import jax.numpy as jnp
from jax.experimental import pallas as pl
from jax.experimental.pallas import tpu as pltpu


def _fused_decoder_kernel(*refs, n_layers):
    """refs = (x_ref, w0, b0, w1, b1, ..., w_{L-1}, b_{L-1}, o_ref)."""
    x_ref = refs[0]
    o_ref = refs[-1]

    h = x_ref[...]
    for i in range(n_layers):
        w = refs[1 + 2 * i][...]
        b = refs[2 + 2 * i][...]          # (1, out) -> broadcasts over batch rows
        h = jnp.dot(h, w, preferred_element_type=jnp.float32) + b
        if i < n_layers - 1:              # hidden layers get ReLU; final Linear does not
            h = jnp.maximum(h, 0.0)
    o_ref[...] = h.astype(o_ref.dtype)


def decoder_forward_pallas(params, x):
    """Fused Decoder.forward: all layers in one VMEM-resident pallas_call."""
    n_layers = len(params)
    assert n_layers >= 1
    M = x.shape[0]
    n_out = params[-1][0].shape[1]

    flat_inputs = [x]
    total_bytes = x.size * x.dtype.itemsize
    widest = x.shape[1]
    for w, b in params:
        assert w.shape[0] == flat_inputs[-1].shape[1] if len(flat_inputs) == 1 else True
        flat_inputs.append(w)
        flat_inputs.append(b.reshape(1, -1))
        total_bytes += w.size * w.dtype.itemsize + b.size * b.dtype.itemsize
        widest = max(widest, w.shape[1])
    # Intermediate activations (live in VMEM/vregs inside the kernel body).
    total_bytes += M * widest * 4

    # VMEM budget: generous margin, floored at the default scoped limit and
    # capped at v7x physical VMEM. Everything here is a few hundred KiB.
    vmem_limit = int(min(64 << 20, max(4 * total_bytes + (2 << 20), 16 << 20)))

    kernel = functools.partial(_fused_decoder_kernel, n_layers=n_layers)
    return pl.pallas_call(
        kernel,
        out_shape=jax.ShapeDtypeStruct((M, n_out), x.dtype),
        in_specs=[pl.BlockSpec(memory_space=pltpu.MemorySpace.VMEM)]
        * (1 + 2 * n_layers),
        out_specs=pl.BlockSpec(memory_space=pltpu.MemorySpace.VMEM),
        compiler_params=pltpu.CompilerParams(vmem_limit_bytes=vmem_limit),
    )(*flat_inputs)


# Jit the whole forward so there is a single XLA dispatch for the decoder.
decoder_forward = jax.jit(decoder_forward_pallas)


def init_decoder_params(key, z_dim, h_dims, x_dim):
    """Xavier-normal weights, zero biases (matches AE.reset_parameters)."""
    layer_dims = [z_dim, *h_dims, x_dim]
    params = []
    for i in range(1, len(layer_dims)):
        fan_in, fan_out = layer_dims[i - 1], layer_dims[i]
        key, sub = jax.random.split(key)
        std = math.sqrt(2.0 / (fan_in + fan_out))
        w = std * jax.random.normal(sub, (fan_in, fan_out), dtype=jnp.float32)
        b = jnp.zeros((fan_out,), dtype=jnp.float32)
        params.append((w, b))
    return params


def decoder_reference(params, x):
    h = x
    n_layers = len(params)
    for idx, (w, b) in enumerate(params):
        h = h @ w + b
        if idx < n_layers - 1:
            h = jnp.maximum(h, 0.0)
    return h


if __name__ == "__main__":
    key = jax.random.PRNGKey(0)
    batch = 8

    # Case 1: decoder with hidden layers: dims = [z_dim, [256, 128], x_dim]
    z_dim, h_dims, x_dim = 128, [256, 128], 512
    kp, kx, key = jax.random.split(key, 3)
    params = init_decoder_params(kp, z_dim, h_dims, x_dim)
    x = jax.random.normal(kx, (batch, z_dim), dtype=jnp.float32)

    out = jax.block_until_ready(decoder_forward(params, x))
    ref = decoder_reference(params, x)
    assert out.shape == (batch, x_dim)
    assert jnp.allclose(out, ref, atol=1e-4, rtol=1e-4), "mismatch vs reference (hidden)"

    # Case 2: decode_dim = [] as in the original script -> single Linear, no ReLU.
    z_dim2, x_dim2 = 32, 256
    kp2, kx2, key = jax.random.split(key, 3)
    params2 = init_decoder_params(kp2, z_dim2, [], x_dim2)
    x2 = jax.random.normal(kx2, (batch, z_dim2), dtype=jnp.float32)

    out2 = jax.block_until_ready(decoder_forward(params2, x2))
    ref2 = decoder_reference(params2, x2)
    assert out2.shape == (batch, x_dim2)
    assert jnp.allclose(out2, ref2, atol=1e-4, rtol=1e-4), "mismatch vs reference (no hidden)"

    print("KERNEL_OK")
</pallas_src>

<mosaic_0001>
module attributes {stable_mosaic.version = 11 : i64} {
  func.func @_fused_decoder_kernel(%arg0: memref<8x128xf32, #tpu.memory_space<vmem>>, %arg1: memref<128x256xf32, #tpu.memory_space<vmem>>, %arg2: memref<1x256xf32, #tpu.memory_space<vmem>>, %arg3: memref<256x128xf32, #tpu.memory_space<vmem>>, %arg4: memref<1x128xf32, #tpu.memory_space<vmem>>, %arg5: memref<128x512xf32, #tpu.memory_space<vmem>>, %arg6: memref<1x512xf32, #tpu.memory_space<vmem>>, %arg7: memref<8x512xf32, #tpu.memory_space<vmem>>) attributes {dimension_semantics = [], scalar_prefetch = 0 : i64, scratch_operands = 0 : i64, tpu.core_type = #tpu.core_type<tc>} {
    %c0 = arith.constant 0 : index
    %c0_0 = arith.constant 0 : index
    %0 = vector.load %arg0[%c0, %c0_0] : memref<8x128xf32, #tpu.memory_space<vmem>>, vector<8x128xf32>
    %c0_1 = arith.constant 0 : index
    %c0_2 = arith.constant 0 : index
    %1 = vector.load %arg1[%c0_1, %c0_2] : memref<128x256xf32, #tpu.memory_space<vmem>>, vector<128x256xf32>
    %c0_3 = arith.constant 0 : index
    %c0_4 = arith.constant 0 : index
    %2 = vector.load %arg2[%c0_3, %c0_4] : memref<1x256xf32, #tpu.memory_space<vmem>>, vector<1x256xf32>
    %cst = arith.constant dense<0.000000e+00> : vector<8x256xf32>
    %3 = tpu.matmul %0, %1, %cst {dimension_numbers = #tpu.dot_dimension_numbers<[1], [0], [0], [1], [0, 0, 1, 1], [], []>} : vector<8x128xf32>, vector<128x256xf32>, vector<8x256xf32> -> vector<8x256xf32>
    %4 = vector.broadcast %2 : vector<1x256xf32> to vector<8x256xf32>
    %5 = arith.addf %3, %4 : vector<8x256xf32>
    %cst_5 = arith.constant 0.000000e+00 : f32
    %6 = vector.broadcast %cst_5 : f32 to vector<8x256xf32>
    %7 = arith.maximumf %5, %6 : vector<8x256xf32>
    %c0_6 = arith.constant 0 : index
    %c0_7 = arith.constant 0 : index
    %8 = vector.load %arg3[%c0_6, %c0_7] : memref<256x128xf32, #tpu.memory_space<vmem>>, vector<256x128xf32>
    %c0_8 = arith.constant 0 : index
    %c0_9 = arith.constant 0 : index
    %9 = vector.load %arg4[%c0_8, %c0_9] : memref<1x128xf32, #tpu.memory_space<vmem>>, vector<1x128xf32>
    %cst_10 = arith.constant dense<0.000000e+00> : vector<8x128xf32>
    %10 = tpu.matmul %7, %8, %cst_10 {dimension_numbers = #tpu.dot_dimension_numbers<[1], [0], [0], [1], [0, 0, 1, 1], [], []>} : vector<8x256xf32>, vector<256x128xf32>, vector<8x128xf32> -> vector<8x128xf32>
    %11 = vector.broadcast %9 : vector<1x128xf32> to vector<8x128xf32>
    %12 = arith.addf %10, %11 : vector<8x128xf32>
    %cst_11 = arith.constant 0.000000e+00 : f32
    %13 = vector.broadcast %cst_11 : f32 to vector<8x128xf32>
    %14 = arith.maximumf %12, %13 : vector<8x128xf32>
    %c0_12 = arith.constant 0 : index
    %c0_13 = arith.constant 0 : index
    %15 = vector.load %arg5[%c0_12, %c0_13] : memref<128x512xf32, #tpu.memory_space<vmem>>, vector<128x512xf32>
    %c0_14 = arith.constant 0 : index
    %c0_15 = arith.constant 0 : index
    %16 = vector.load %arg6[%c0_14, %c0_15] : memref<1x512xf32, #tpu.memory_space<vmem>>, vector<1x512xf32>
    %cst_16 = arith.constant dense<0.000000e+00> : vector<8x512xf32>
    %17 = tpu.matmul %14, %15, %cst_16 {dimension_numbers = #tpu.dot_dimension_numbers<[1], [0], [0], [1], [0, 0, 1, 1], [], []>} : vector<8x128xf32>, vector<128x512xf32>, vector<8x512xf32> -> vector<8x512xf32>
    %18 = vector.broadcast %16 : vector<1x512xf32> to vector<8x512xf32>
    %19 = arith.addf %17, %18 : vector<8x512xf32>
    %c0_17 = arith.constant 0 : index
    %c0_18 = arith.constant 0 : index
    %20 = vector.load %arg7[%c0_17, %c0_18] : memref<8x512xf32, #tpu.memory_space<vmem>>, vector<8x512xf32>
    tpu.vector_store %arg7[%c0_17, %c0_18], %19 {strides = array<i32>} : memref<8x512xf32, #tpu.memory_space<vmem>>, vector<8x512xf32>,
    return
  }
}

</mosaic_0001>

<llo_original>
// kernel: decoder_forward_pallas.1
$region0: #{decoder_forward_pallas.1}
  #allocation0 [shape = 'u32[]', space=smem, size = 0x4, offset = 0x4, fixed_abs, tag = 'smem constant byte address 0x4 - core index']
  #allocation1 [shape = 'u32[144,128]{1,0:T(1,128)}', space=vmem, size = 0x12000, scoped, tag = 'internal scratch']
  %s0 = inlined_call_operand.vmem [shape: f32[8,128], index: 0, kind: input, shape index: {}]
  %s1 = inlined_call_operand.hbm [shape: f32[128,256], index: 1, kind: input, shape index: {}]
  %s2 = inlined_call_operand.vmem [shape: f32[1,256], index: 2, kind: input, shape index: {}]
  %s3 = inlined_call_operand.hbm [shape: f32[256,128], index: 3, kind: input, shape index: {}]
  %s4 = inlined_call_operand.vmem [shape: f32[1,128], index: 4, kind: input, shape index: {}]
  %s5 = inlined_call_operand.hbm [shape: f32[128,512], index: 5, kind: input, shape index: {}]
  %s6 = inlined_call_operand.vmem [shape: f32[1,512], index: 6, kind: input, shape index: {}]
  %s7 = inlined_call_operand.hbm [shape: f32[8,512], index: 7, kind: output, shape index: {}]
  %s8 = sld [smem:[#allocation0]]
  $region50: #{decoder_forward_pallas.1} parent=0
    _
  %s10 = ssub.s32 1, %s8
  %s11 = scalar_select 0, %s10, %s8
  $region1: #{decoder_forward_pallas.1} parent=0
    #allocation2 [shape = 'u8[131072]{0}', space=vmem, size = 0x20000, scoped, tag = 'input window, operand 1, single buffered']
    #allocation3 [shape = 's32[1]{0}', space=sflag, size = 0x4, scoped, tag = 'scoped memory for decoder_forward_pallas.1']
    #allocation4 [shape = 's32[1]{0}', space=sflag, size = 0x4, scoped, tag = 'scoped memory for decoder_forward_pallas.1']
    #allocation5 [shape = 'u8[131072]{0}', space=vmem, size = 0x20000, scoped, tag = 'input window, operand 3, single buffered']
    #allocation6 [shape = 's32[1]{0}', space=sflag, size = 0x4, scoped, tag = 'scoped memory for decoder_forward_pallas.1']
    #allocation7 [shape = 'u8[262144]{0}', space=vmem, size = 0x40000, scoped, tag = 'input window, operand 5, single buffered']
    #allocation8 [shape = 'u8[16384]{0}', space=vmem, size = 0x4000, scoped, tag = 'output window, operand 0, single buffered']
    %12 = vsyncpa [#allocation3], 0
    %13 = vsyncpa [#allocation6], 0
    %14 = vsyncpa [#allocation4], 0
    // Predicated region
    $region2: #{decoder_forward_pallas.1} parent=1 // pred_check
      _
    $region3: #{decoder_forward_pallas.1} parent=1 // pred_check_branch
      %16 = sbr.rel (0) target = $region5
    $region4: #{decoder_forward_pallas.1} parent=1 // pred_region
      _
    $region5: #{decoder_forward_pallas.1} parent=1 // pred_fallthru
      _
    // Predicated region
    $region6: #{decoder_forward_pallas.1} parent=1 // pred_check
      _
    $region7: #{decoder_forward_pallas.1} parent=1 // pred_check_branch
      %18 = sbr.rel (0) target = $region9
    $region8: #{decoder_forward_pallas.1} parent=1 // pred_region
      %s20 = ssub.s32 4096, 4096
      %21 = vsyncadd [#allocation3], %s20
      %s22 = sshll.u32 [#allocation2], 4
      %s23 = int_to_ptr.vmem [resolvable:$true] %s22
      %28 = dma.hbm_to_vmem [thread:$0]  %s1, 4096, %s23, [#allocation3], 256, 256, 16
    $region9: #{decoder_forward_pallas.1} parent=1 // pred_fallthru
      _
    // Predicated region
    $region10: #{decoder_forward_pallas.1} parent=1 // pred_check
      _
    $region11: #{decoder_forward_pallas.1} parent=1 // pred_check_branch
      %30 = sbr.rel (0) target = $region13
    $region12: #{decoder_forward_pallas.1} parent=1 // pred_region
      _
    $region13: #{decoder_forward_pallas.1} parent=1 // pred_fallthru
      _
    // Predicated region
    $region14: #{decoder_forward_pallas.1} parent=1 // pred_check
      _
    $region15: #{decoder_forward_pallas.1} parent=1 // pred_check_branch
      %32 = sbr.rel (0) target = $region17
    $region16: #{decoder_forward_pallas.1} parent=1 // pred_region
      %s34 = ssub.s32 4096, 4096
      %35 = vsyncadd [#allocation6], %s34
      %s36 = sshll.u32 [#allocation5], 4
      %s37 = int_to_ptr.vmem [resolvable:$true] %s36
      %42 = dma.hbm_to_vmem [thread:$0]  %s3, 4096, %s37, [#allocation6], 128, 128, 8
    $region17: #{decoder_forward_pallas.1} parent=1 // pred_fallthru
      _
    // Predicated region
    $region18: #{decoder_forward_pallas.1} parent=1 // pred_check
      _
    $region19: #{decoder_forward_pallas.1} parent=1 // pred_check_branch
      %44 = sbr.rel (0) target = $region21
    $region20: #{decoder_forward_pallas.1} parent=1 // pred_region
      _
    $region21: #{decoder_forward_pallas.1} parent=1 // pred_fallthru
      _
    // Predicated region
    $region22: #{decoder_forward_pallas.1} parent=1 // pred_check
      _
    $region23: #{decoder_forward_pallas.1} parent=1 // pred_check_branch
      %46 = sbr.rel (0) target = $region25
    $region24: #{decoder_forward_pallas.1} parent=1 // pred_region
      %s48 = ssub.s32 8192, 8192
      %49 = vsyncadd [#allocation6], %s48
      %s50 = sshll.u32 [#allocation7], 4
      %s51 = int_to_ptr.vmem [resolvable:$true] %s50
      %56 = dma.hbm_to_vmem [thread:$0]  %s5, 8192, %s51, [#allocation6], 512, 512, 32
    $region25: #{decoder_forward_pallas.1} parent=1 // pred_fallthru
      _
    // Predicated region
    $region26: #{decoder_forward_pallas.1} parent=1 // pred_check
      _
    $region27: #{decoder_forward_pallas.1} parent=1 // pred_check_branch
      %58 = sbr.rel (0) target = $region29
    $region28: #{decoder_forward_pallas.1} parent=1 // pred_region
      _
    $region29: #{decoder_forward_pallas.1} parent=1 // pred_fallthru
      _
    // Predicated region
    $region30: #{decoder_forward_pallas.1} parent=1 // pred_check
      _
    $region31: #{decoder_forward_pallas.1} parent=1 // pred_check_branch
      %60 = sbr.rel (0) target = $region33
    $region32: #{decoder_forward_pallas.1} parent=1 // pred_region
      %61 = dma.done [#allocation3], 4096
    $region33: #{decoder_forward_pallas.1} parent=1 // pred_fallthru
      _
    // Predicated region
    $region34: #{decoder_forward_pallas.1} parent=1 // pred_check
      _
    $region35: #{decoder_forward_pallas.1} parent=1 // pred_check_branch
      %63 = sbr.rel (0) target = $region37
    $region36: #{decoder_forward_pallas.1} parent=1 // pred_region
      %64 = dma.done [#allocation6], 4096
    $region37: #{decoder_forward_pallas.1} parent=1 // pred_fallthru
      _
    // Predicated region
    $region38: #{decoder_forward_pallas.1} parent=1 // pred_check
      _
    $region39: #{decoder_forward_pallas.1} parent=1 // pred_check_branch
      %66 = sbr.rel (0) target = $region41
    $region40: #{decoder_forward_pallas.1} parent=1 // pred_region
      %67 = dma.done [#allocation6], 8192
    $region41: #{decoder_forward_pallas.1} parent=1 // pred_fallthru
      _
    %v68 = vld [vmem:[%s0] sm:$0xff]
    %v69 = vld [vmem:[#allocation2] sm:$0xff]
    %v70 = vld [vmem:[#allocation2 + $0x8] sm:$0xff]
    %v71 = vld [vmem:[#allocation2 + $0x10] sm:$0xff]
    %v72 = vld [vmem:[#allocation2 + $0x18] sm:$0xff]
    %v73 = vld [vmem:[#allocation2 + $0x20] sm:$0xff]
    %v74 = vld [vmem:[#allocation2 + $0x28] sm:$0xff]
    %v75 = vld [vmem:[#allocation2 + $0x30] sm:$0xff]
    %v76 = vld [vmem:[#allocation2 + $0x38] sm:$0xff]
    %v77 = vld [vmem:[#allocation2 + $0x40] sm:$0xff]
    %v78 = vld [vmem:[#allocation2 + $0x48] sm:$0xff]
    %v79 = vld [vmem:[#allocation2 + $0x50] sm:$0xff]
    %v80 = vld [vmem:[#allocation2 + $0x58] sm:$0xff]
    %v81 = vld [vmem:[#allocation2 + $0x60] sm:$0xff]
    %v82 = vld [vmem:[#allocation2 + $0x68] sm:$0xff]
    %v83 = vld [vmem:[#allocation2 + $0x70] sm:$0xff]
    %v84 = vld [vmem:[#allocation2 + $0x78] sm:$0xff]
    %v85 = vld [vmem:[#allocation2 + $0x80] sm:$0xff]
    %v86 = vld [vmem:[#allocation2 + $0x88] sm:$0xff]
    %v87 = vld [vmem:[#allocation2 + $0x90] sm:$0xff]
    %v88 = vld [vmem:[#allocation2 + $0x98] sm:$0xff]
    %v89 = vld [vmem:[#allocation2 + $0xa0] sm:$0xff]
    %v90 = vld [vmem:[#allocation2 + $0xa8] sm:$0xff]
    %v91 = vld [vmem:[#allocation2 + $0xb0] sm:$0xff]
    %v92 = vld [vmem:[#allocation2 + $0xb8] sm:$0xff]
    %v93 = vld [vmem:[#allocation2 + $0xc0] sm:$0xff]
    %v94 = vld [vmem:[#allocation2 + $0xc8] sm:$0xff]
    %v95 = vld [vmem:[#allocation2 + $0xd0] sm:$0xff]
    %v96 = vld [vmem:[#allocation2 + $0xd8] sm:$0xff]
    %v97 = vld [vmem:[#allocation2 + $0xe0] sm:$0xff]
    %v98 = vld [vmem:[#allocation2 + $0xe8] sm:$0xff]
    %v99 = vld [vmem:[#allocation2 + $0xf0] sm:$0xff]
    %v100 = vld [vmem:[#allocation2 + $0xf8] sm:$0xff]
    %v101 = vld [vmem:[%s2] sm:$0x3]
    %v103 = vlaneseq
    %v104 = vshrl.u32 %v103, 7
    %v105 = vsub.s32 0, %v104
    %v106 = vrot.slane %v101, %v105
    %v107 = vlaneseq
    %v108 = vshrl.u32 %v107, 7
    %v109 = vsub.s32 1, %v108
    %v110 = vrot.slane %v101, %v109
    %113 = vmatprep.subr.mxu0 %v70
    %114 = vmatpush1.msra.mxu0 %v69
    %115 = vmatprep.subr.mxu0 %v72
    %116 = vmatpush1.msra.mxu0 %v71
    %117 = vmatprep.subr.mxu0 %v74
    %118 = vmatpush1.msra.mxu0 %v73
    %119 = vmatprep.subr.mxu0 %v76
    %120 = vmatpush1.msra.mxu0 %v75
    %121 = vmatprep.subr.mxu0 %v78
    %122 = vmatpush1.msra.mxu0 %v77
    %123 = vmatprep.subr.mxu0 %v80
    %124 = vmatpush1.msra.mxu0 %v79
    %125 = vmatprep.subr.mxu0 %v82
    %126 = vmatpush1.msra.mxu0 %v81
    %127 = vmatprep.subr.mxu0 %v84
    %128 = vmatpush1.msra.mxu0 %v83
    %129 = vmatprep.subr.mxu0 %v86
    %130 = vmatpush1.msra.mxu0 %v85
    %131 = vmatprep.subr.mxu0 %v88
    %132 = vmatpush1.msra.mxu0 %v87
    %133 = vmatprep.subr.mxu0 %v90
    %134 = vmatpush1.msra.mxu0 %v89
    %135 = vmatprep.subr.mxu0 %v92
    %136 = vmatpush1.msra.mxu0 %v91
    %137 = vmatprep.subr.mxu0 %v94
    %138 = vmatpush1.msra.mxu0 %v93
    %139 = vmatprep.subr.mxu0 %v96
    %140 = vmatpush1.msra.mxu0 %v95
    %141 = vmatprep.subr.mxu0 %v98
    %142 = vmatpush1.msra.mxu0 %v97
    %143 = vmatprep.subr.mxu0 %v100
    %144 = vmatpush1.msra.mxu0 %v99
    %145 = vmatprep.subr.mxu0 0.0
    %146 = vmatpush1.msra.mxu0 0.0
    %147 = vmatprep.subr.mxu0 0.0
    %148 = vmatpush1.msra.mxu0 0.0
    %149 = vmatprep.subr.mxu0 0.0
    %150 = vmatpush1.msra.mxu0 0.0
    %151 = vmatprep.subr.mxu0 0.0
    %152 = vmatpush1.msra.mxu0 0.0
    %153 = vmatprep.subr.mxu0 0.0
    %154 = vmatpush1.msra.mxu0 0.0
    %155 = vmatprep.subr.mxu0 0.0
    %156 = vmatpush1.msra.mxu0 0.0
    %157 = vmatprep.subr.mxu0 0.0
    %158 = vmatpush1.msra.mxu0 0.0
    %159 = vmatprep.subr.mxu0 0.0
    %160 = vmatpush1.msra.mxu0 0.0
    %161 = vmatprep.subr.mxu0 0.0
    %162 = vmatpush1.msra.mxu0 0.0
    %163 = vmatprep.subr.mxu0 0.0
    %164 = vmatpush1.msra.mxu0 0.0
    %165 = vmatprep.subr.mxu0 0.0
    %166 = vmatpush1.msra.mxu0 0.0
    %167 = vmatprep.subr.mxu0 0.0
    %168 = vmatpush1.msra.mxu0 0.0
    %169 = vmatprep.subr.mxu0 0.0
    %170 = vmatpush1.msra.mxu0 0.0
    %171 = vmatprep.subr.mxu0 0.0
    %172 = vmatpush1.msra.mxu0 0.0
    %173 = vmatprep.subr.mxu0 0.0
    %174 = vmatpush1.msra.mxu0 0.0
    %175 = vmatprep.subr.mxu0 0.0
    %176 = vmatpush1.msra.mxu0 0.0
    %177 = vmatprep.mubr.f32.mxu0 0.0
    %178 = vmatmul.mubr.f32.gmra.mrb[0].mxu0 %v68
    %v179 = vpop.f32.mrb[0].mxu0
    %v180 = vadd.f32 %v106, %v179
    %v181 = vpop.f32.mrb[0].mxu0
    %v182 = vadd.f32 %v110, %v181
    %183 = vdwg.mxu0
    %v184 = vmax.f32 %v180, 0.0
    %v185 = vmax.f32 %v182, 0.0
    %v186 = vld [vmem:[#allocation5] sm:$0xff]
    %v187 = vld [vmem:[#allocation5 + $0x8] sm:$0xff]
    %v188 = vld [vmem:[#allocation5 + $0x10] sm:$0xff]
    %v189 = vld [vmem:[#allocation5 + $0x18] sm:$0xff]
    %v190 = vld [vmem:[#allocation5 + $0x20] sm:$0xff]
    %v191 = vld [vmem:[#allocation5 + $0x28] sm:$0xff]
    %v192 = vld [vmem:[#allocation5 + $0x30] sm:$0xff]
    %v193 = vld [vmem:[#allocation5 + $0x38] sm:$0xff]
    %v194 = vld [vmem:[#allocation5 + $0x40] sm:$0xff]
    %v195 = vld [vmem:[#allocation5 + $0x48] sm:$0xff]
    %v196 = vld [vmem:[#allocation5 + $0x50] sm:$0xff]
    %v197 = vld [vmem:[#allocation5 + $0x58] sm:$0xff]
    %v198 = vld [vmem:[#allocation5 + $0x60] sm:$0xff]
    %v199 = vld [vmem:[#allocation5 + $0x68] sm:$0xff]
    %v200 = vld [vmem:[#allocation5 + $0x70] sm:$0xff]
    %v201 = vld [vmem:[#allocation5 + $0x78] sm:$0xff]
    %v202 = vld [vmem:[#allocation5 + $0x80] sm:$0xff]
    %v203 = vld [vmem:[#allocation5 + $0x88] sm:$0xff]
    %v204 = vld [vmem:[#allocation5 + $0x90] sm:$0xff]
    %v205 = vld [vmem:[#allocation5 + $0x98] sm:$0xff]
    %v206 = vld [vmem:[#allocation5 + $0xa0] sm:$0xff]
    %v207 = vld [vmem:[#allocation5 + $0xa8] sm:$0xff]
    %v208 = vld [vmem:[#allocation5 + $0xb0] sm:$0xff]
    %v209 = vld [vmem:[#allocation5 + $0xb8] sm:$0xff]
    %v210 = vld [vmem:[#allocation5 + $0xc0] sm:$0xff]
    %v211 = vld [vmem:[#allocation5 + $0xc8] sm:$0xff]
    %v212 = vld [vmem:[#allocation5 + $0xd0] sm:$0xff]
    %v213 = vld [vmem:[#allocation5 + $0xd8] sm:$0xff]
    %v214 = vld [vmem:[#allocation5 + $0xe0] sm:$0xff]
    %v215 = vld [vmem:[#allocation5 + $0xe8] sm:$0xff]
    %v216 = vld [vmem:[#allocation5 + $0xf0] sm:$0xff]
    %v217 = vld [vmem:[#allocation5 + $0xf8] sm:$0xff]
    %v218 = vld [vmem:[%s4] sm:$0x1]
    %v220 = vlaneseq
    %v221 = vshrl.u32 %v220, 7
    %v222 = vsub.s32 0, %v221
    %v223 = vrot.slane %v218, %v222
    %225 = vmatprep.subr.mxu0 0.0
    %226 = vmatpush1.msra.mxu0 %v186
    %227 = vmatprep.subr.mxu0 0.0
    %228 = vmatpush1.msra.mxu0 %v187
    %229 = vmatprep.subr.mxu0 0.0
    %230 = vmatpush1.msra.mxu0 %v188
    %231 = vmatprep.subr.mxu0 0.0
    %232 = vmatpush1.msra.mxu0 %v189
    %233 = vmatprep.subr.mxu0 0.0
    %234 = vmatpush1.msra.mxu0 %v190
    %235 = vmatprep.subr.mxu0 0.0
    %236 = vmatpush1.msra.mxu0 %v191
    %237 = vmatprep.subr.mxu0 0.0
    %238 = vmatpush1.msra.mxu0 %v192
    %239 = vmatprep.subr.mxu0 0.0
    %240 = vmatpush1.msra.mxu0 %v193
    %241 = vmatprep.subr.mxu0 0.0
    %242 = vmatpush1.msra.mxu0 %v194
    %243 = vmatprep.subr.mxu0 0.0
    %244 = vmatpush1.msra.mxu0 %v195
    %245 = vmatprep.subr.mxu0 0.0
    %246 = vmatpush1.msra.mxu0 %v196
    %247 = vmatprep.subr.mxu0 0.0
    %248 = vmatpush1.msra.mxu0 %v197
    %249 = vmatprep.subr.mxu0 0.0
    %250 = vmatpush1.msra.mxu0 %v198
    %251 = vmatprep.subr.mxu0 0.0
    %252 = vmatpush1.msra.mxu0 %v199
    %253 = vmatprep.subr.mxu0 0.0
    %254 = vmatpush1.msra.mxu0 %v200
    %255 = vmatprep.subr.mxu0 0.0
    %256 = vmatpush1.msra.mxu0 %v201
    %257 = vmatprep.subr.mxu0 0.0
    %258 = vmatpush1.msra.mxu0 %v202
    %259 = vmatprep.subr.mxu0 0.0
    %260 = vmatpush1.msra.mxu0 %v203
    %261 = vmatprep.subr.mxu0 0.0
    %262 = vmatpush1.msra.mxu0 %v204
    %263 = vmatprep.subr.mxu0 0.0
    %264 = vmatpush1.msra.mxu0 %v205
    %265 = vmatprep.subr.mxu0 0.0
    %266 = vmatpush1.msra.mxu0 %v206
    %267 = vmatprep.subr.mxu0 0.0
    %268 = vmatpush1.msra.mxu0 %v207
    %269 = vmatprep.subr.mxu0 0.0
    %270 = vmatpush1.msra.mxu0 %v208
    %271 = vmatprep.subr.mxu0 0.0
    %272 = vmatpush1.msra.mxu0 %v209
    %273 = vmatprep.subr.mxu0 0.0
    %274 = vmatpush1.msra.mxu0 %v210
    %275 = vmatprep.subr.mxu0 0.0
    %276 = vmatpush1.msra.mxu0 %v211
    %277 = vmatprep.subr.mxu0 0.0
    %278 = vmatpush1.msra.mxu0 %v212
    %279 = vmatprep.subr.mxu0 0.0
    %280 = vmatpush1.msra.mxu0 %v213
    %281 = vmatprep.subr.mxu0 0.0
    %282 = vmatpush1.msra.mxu0 %v214
    %283 = vmatprep.subr.mxu0 0.0
    %284 = vmatpush1.msra.mxu0 %v215
    %285 = vmatprep.subr.mxu0 0.0
    %286 = vmatpush1.msra.mxu0 %v216
    %287 = vmatprep.subr.mxu0 0.0
    %288 = vmatpush1.msra.mxu0 %v217
    %289 = vmatprep.mubr.f32.mxu0 %v185
    %290 = vmatmul.mubr.f32.gmra.mrb[0].mxu0 %v184
    %v291 = vpop.f32.mrb[0].mxu0
    %v292 = vadd.f32 %v223, %v291
    %v293 = vpop.f32.mrb[0].mxu0
    %294 = vdwg.mxu0
    %v295 = vmax.f32 %v292, 0.0
    %v296 = vld [vmem:[#allocation7] sm:$0xff]
    %v297 = vld [vmem:[#allocation7 + $0x8] sm:$0xff]
    %v298 = vld [vmem:[#allocation7 + $0x10] sm:$0xff]
    %v299 = vld [vmem:[#allocation7 + $0x18] sm:$0xff]
    %v300 = vld [vmem:[#allocation7 + $0x20] sm:$0xff]
    %v301 = vld [vmem:[#allocation7 + $0x28] sm:$0xff]
    %v302 = vld [vmem:[#allocation7 + $0x30] sm:$0xff]
    %v303 = vld [vmem:[#allocation7 + $0x38] sm:$0xff]
    %v304 = vld [vmem:[#allocation7 + $0x40] sm:$0xff]
    %v305 = vld [vmem:[#allocation7 + $0x48] sm:$0xff]
    %v306 = vld [vmem:[#allocation7 + $0x50] sm:$0xff]
    %v307 = vld [vmem:[#allocation7 + $0x58] sm:$0xff]
    %v308 = vld [vmem:[#allocation7 + $0x60] sm:$0xff]
    %v309 = vld [vmem:[#allocation7 + $0x68] sm:$0xff]
    %v310 = vld [vmem:[#allocation7 + $0x70] sm:$0xff]
    %v311 = vld [vmem:[#allocation7 + $0x78] sm:$0xff]
    %v312 = vld [vmem:[#allocation7 + $0x80] sm:$0xff]
    %v313 = vld [vmem:[#allocation7 + $0x88] sm:$0xff]
    %v314 = vld [vmem:[#allocation7 + $0x90] sm:$0xff]
    %v315 = vld [vmem:[#allocation7 + $0x98] sm:$0xff]
    %v316 = vld [vmem:[#allocation7 + $0xa0] sm:$0xff]
    %v317 = vld [vmem:[#allocation7 + $0xa8] sm:$0xff]
    %v318 = vld [vmem:[#allocation7 + $0xb0] sm:$0xff]
    %v319 = vld [vmem:[#allocation7 + $0xb8] sm:$0xff]
    %v320 = vld [vmem:[#allocation7 + $0xc0] sm:$0xff]
    %v321 = vld [vmem:[#allocation7 + $0xc8] sm:$0xff]
    %v322 = vld [vmem:[#allocation7 + $0xd0] sm:$0xff]
    %v323 = vld [vmem:[#allocation7 + $0xd8] sm:$0xff]
    %v324 = vld [vmem:[#allocation7 + $0xe0] sm:$0xff]
    %v325 = vld [vmem:[#allocation7 + $0xe8] sm:$0xff]
    %v326 = vld [vmem:[#allocation7 + $0xf0] sm:$0xff]
    %v327 = vld [vmem:[#allocation7 + $0xf8] sm:$0xff]
    %v328 = vld [vmem:[#allocation7 + $0x100] sm:$0xff]
    %v329 = vld [vmem:[#allocation7 + $0x108] sm:$0xff]
    %v330 = vld [vmem:[#allocation7 + $0x110] sm:$0xff]
    %v331 = vld [vmem:[#allocation7 + $0x118] sm:$0xff]
    %v332 = vld [vmem:[#allocation7 + $0x120] sm:$0xff]
    %v333 = vld [vmem:[#allocation7 + $0x128] sm:$0xff]
    %v334 = vld [vmem:[#allocation7 + $0x130] sm:$0xff]
    %v335 = vld [vmem:[#allocation7 + $0x138] sm:$0xff]
    %v336 = vld [vmem:[#allocation7 + $0x140] sm:$0xff]
    %v337 = vld [vmem:[#allocation7 + $0x148] sm:$0xff]
    %v338 = vld [vmem:[#allocation7 + $0x150] sm:$0xff]
    %v339 = vld [vmem:[#allocation7 + $0x158] sm:$0xff]
    %v340 = vld [vmem:[#allocation7 + $0x160] sm:$0xff]
    %v341 = vld [vmem:[#allocation7 + $0x168] sm:$0xff]
    %v342 = vld [vmem:[#allocation7 + $0x170] sm:$0xff]
    %v343 = vld [vmem:[#allocation7 + $0x178] sm:$0xff]
    %v344 = vld [vmem:[#allocation7 + $0x180] sm:$0xff]
    %v345 = vld [vmem:[#allocation7 + $0x188] sm:$0xff]
    %v346 = vld [vmem:[#allocation7 + $0x190] sm:$0xff]
    %v347 = vld [vmem:[#allocation7 + $0x198] sm:$0xff]
    %v348 = vld [vmem:[#allocation7 + $0x1a0] sm:$0xff]
    %v349 = vld [vmem:[#allocation7 + $0x1a8] sm:$0xff]
    %v350 = vld [vmem:[#allocation7 + $0x1b0] sm:$0xff]
    %v351 = vld [vmem:[#allocation7 + $0x1b8] sm:$0xff]
    %v352 = vld [vmem:[#allocation7 + $0x1c0] sm:$0xff]
    %v353 = vld [vmem:[#allocation7 + $0x1c8] sm:$0xff]
    %v354 = vld [vmem:[#allocation7 + $0x1d0] sm:$0xff]
    %v355 = vld [vmem:[#allocation7 + $0x1d8] sm:$0xff]
    %v356 = vld [vmem:[#allocation7 + $0x1e0] sm:$0xff]
    %v357 = vld [vmem:[#allocation7 + $0x1e8] sm:$0xff]
    %v358 = vld [vmem:[#allocation7 + $0x1f0] sm:$0xff]
    %v359 = vld [vmem:[#allocation7 + $0x1f8] sm:$0xff]
    %v360 = vld [vmem:[%s6] sm:$0xf]
    %v362 = vlaneseq
    %v363 = vshrl.u32 %v362, 7
    %v364 = vsub.s32 0, %v363
    %v365 = vrot.slane %v360, %v364
    %v366 = vlaneseq
    %v367 = vshrl.u32 %v366, 7
    %v368 = vsub.s32 1, %v367
    %v369 = vrot.slane %v360, %v368
    %v370 = vlaneseq
    %v371 = vshrl.u32 %v370, 7
    %v372 = vsub.s32 2, %v371
    %v373 = vrot.slane %v360, %v372
    %v374 = vlaneseq
    %v375 = vshrl.u32 %v374, 7
    %v376 = vsub.s32 3, %v375
    %v377 = vrot.slane %v360, %v376
    %382 = vmatprep.subr.mxu0 %v297
    %383 = vmatpush1.msra.mxu0 %v296
    %384 = vmatprep.subr.mxu0 %v301
    %385 = vmatpush1.msra.mxu0 %v300
    %386 = vmatprep.subr.mxu0 %v305
    %387 = vmatpush1.msra.mxu0 %v304
    %388 = vmatprep.subr.mxu0 %v309
    %389 = vmatpush1.msra.mxu0 %v308
    %390 = vmatprep.subr.mxu0 %v313
    %391 = vmatpush1.msra.mxu0 %v312
    %392 = vmatprep.subr.mxu0 %v317
    %393 = vmatpush1.msra.mxu0 %v316
    %394 = vmatprep.subr.mxu0 %v321
    %395 = vmatpush1.msra.mxu0 %v320
    %396 = vmatprep.subr.mxu0 %v325
    %397 = vmatpush1.msra.mxu0 %v324
    %398 = vmatprep.subr.mxu0 %v329
    %399 = vmatpush1.msra.mxu0 %v328
    %400 = vmatprep.subr.mxu0 %v333
    %401 = vmatpush1.msra.mxu0 %v332
    %402 = vmatprep.subr.mxu0 %v337
    %403 = vmatpush1.msra.mxu0 %v336
    %404 = vmatprep.subr.mxu0 %v341
    %405 = vmatpush1.msra.mxu0 %v340
    %406 = vmatprep.subr.mxu0 %v345
    %407 = vmatpush1.msra.mxu0 %v344
    %408 = vmatprep.subr.mxu0 %v349
    %409 = vmatpush1.msra.mxu0 %v348
    %410 = vmatprep.subr.mxu0 %v353
    %411 = vmatpush1.msra.mxu0 %v352
    %412 = vmatprep.subr.mxu0 %v357
    %413 = vmatpush1.msra.mxu0 %v356
    %414 = vmatprep.subr.mxu0 0.0
    %415 = vmatpush1.msra.mxu0 0.0
    %416 = vmatprep.subr.mxu0 0.0
    %417 = vmatpush1.msra.mxu0 0.0
    %418 = vmatprep.subr.mxu0 0.0
    %419 = vmatpush1.msra.mxu0 0.0
    %420 = vmatprep.subr.mxu0 0.0
    %421 = vmatpush1.msra.mxu0 0.0
    %422 = vmatprep.subr.mxu0 0.0
    %423 = vmatpush1.msra.mxu0 0.0
    %424 = vmatprep.subr.mxu0 0.0
    %425 = vmatpush1.msra.mxu0 0.0
    %426 = vmatprep.subr.mxu0 0.0
    %427 = vmatpush1.msra.mxu0 0.0
    %428 = vmatprep.subr.mxu0 0.0
    %429 = vmatpush1.msra.mxu0 0.0
    %430 = vmatprep.subr.mxu0 0.0
    %431 = vmatpush1.msra.mxu0 0.0
    %432 = vmatprep.subr.mxu0 0.0
    %433 = vmatpush1.msra.mxu0 0.0
    %434 = vmatprep.subr.mxu0 0.0
    %435 = vmatpush1.msra.mxu0 0.0
    %436 = vmatprep.subr.mxu0 0.0
    %437 = vmatpush1.msra.mxu0 0.0
    %438 = vmatprep.subr.mxu0 0.0
    %439 = vmatpush1.msra.mxu0 0.0
    %440 = vmatprep.subr.mxu0 0.0
    %441 = vmatpush1.msra.mxu0 0.0
    %442 = vmatprep.subr.mxu0 0.0
    %443 = vmatpush1.msra.mxu0 0.0
    %444 = vmatprep.subr.mxu0 0.0
    %445 = vmatpush1.msra.mxu0 0.0
    %446 = vmatprep.mubr.f32.mxu0 0.0
    %447 = vmatmul.mubr.f32.gmra.mrb[0].mxu0 %v295
    %v448 = vpop.f32.mrb[0].mxu0
    %v449 = vadd.f32 %v365, %v448
    %v450 = vpop.f32.mrb[0].mxu0
    %v451 = vadd.f32 %v369, %v450
    %452 = vdwg.mxu0
    %453 = vmatprep.subr.mxu0 %v299
    %454 = vmatpush1.msra.mxu0 %v298
    %455 = vmatprep.subr.mxu0 %v303
    %456 = vmatpush1.msra.mxu0 %v302
    %457 = vmatprep.subr.mxu0 %v307
    %458 = vmatpush1.msra.mxu0 %v306
    %459 = vmatprep.subr.mxu0 %v311
    %460 = vmatpush1.msra.mxu0 %v310
    %461 = vmatprep.subr.mxu0 %v315
    %462 = vmatpush1.msra.mxu0 %v314
    %463 = vmatprep.subr.mxu0 %v319
    %464 = vmatpush1.msra.mxu0 %v318
    %465 = vmatprep.subr.mxu0 %v323
    %466 = vmatpush1.msra.mxu0 %v322
    %467 = vmatprep.subr.mxu0 %v327
    %468 = vmatpush1.msra.mxu0 %v326
    %469 = vmatprep.subr.mxu0 %v331
    %470 = vmatpush1.msra.mxu0 %v330
    %471 = vmatprep.subr.mxu0 %v335
    %472 = vmatpush1.msra.mxu0 %v334
    %473 = vmatprep.subr.mxu0 %v339
    %474 = vmatpush1.msra.mxu0 %v338
    %475 = vmatprep.subr.mxu0 %v343
    %476 = vmatpush1.msra.mxu0 %v342
    %477 = vmatprep.subr.mxu0 %v347
    %478 = vmatpush1.msra.mxu0 %v346
    %479 = vmatprep.subr.mxu0 %v351
    %480 = vmatpush1.msra.mxu0 %v350
    %481 = vmatprep.subr.mxu0 %v355
    %482 = vmatpush1.msra.mxu0 %v354
    %483 = vmatprep.subr.mxu0 %v359
    %484 = vmatpush1.msra.mxu0 %v358
    %485 = vmatprep.subr.mxu0 0.0
    %486 = vmatpush1.msra.mxu0 0.0
    %487 = vmatprep.subr.mxu0 0.0
    %488 = vmatpush1.msra.mxu0 0.0
    %489 = vmatprep.subr.mxu0 0.0
    %490 = vmatpush1.msra.mxu0 0.0
    %491 = vmatprep.subr.mxu0 0.0
    %492 = vmatpush1.msra.mxu0 0.0
    %493 = vmatprep.subr.mxu0 0.0
    %494 = vmatpush1.msra.mxu0 0.0
    %495 = vmatprep.subr.mxu0 0.0
    %496 = vmatpush1.msra.mxu0 0.0
    %497 = vmatprep.subr.mxu0 0.0
    %498 = vmatpush1.msra.mxu0 0.0
    %499 = vmatprep.subr.mxu0 0.0
    %500 = vmatpush1.msra.mxu0 0.0
    %501 = vmatprep.subr.mxu0 0.0
    %502 = vmatpush1.msra.mxu0 0.0
    %503 = vmatprep.subr.mxu0 0.0
    %504 = vmatpush1.msra.mxu0 0.0
    %505 = vmatprep.subr.mxu0 0.0
    %506 = vmatpush1.msra.mxu0 0.0
    %507 = vmatprep.subr.mxu0 0.0
    %508 = vmatpush1.msra.mxu0 0.0
    %509 = vmatprep.subr.mxu0 0.0
    %510 = vmatpush1.msra.mxu0 0.0
    %511 = vmatprep.subr.mxu0 0.0
    %512 = vmatpush1.msra.mxu0 0.0
    %513 = vmatprep.subr.mxu0 0.0
    %514 = vmatpush1.msra.mxu0 0.0
    %515 = vmatprep.subr.mxu0 0.0
    %516 = vmatpush1.msra.mxu0 0.0
    %517 = vmatprep.mubr.f32.mxu0 0.0
    %518 = vmatmul.mubr.f32.gmra.mrb[0].mxu0 %v295
    %v519 = vpop.f32.mrb[0].mxu0
    %v520 = vadd.f32 %v373, %v519
    %v521 = vpop.f32.mrb[0].mxu0
    %v522 = vadd.f32 %v377, %v521
    %523 = vdwg.mxu0
    %524 = vst [vmem:[#allocation8] sm:$0xff] %v449
    %525 = vst [vmem:[#allocation8 + $0x8] sm:$0xff] %v451
    %526 = vst [vmem:[#allocation8 + $0x10] sm:$0xff] %v520
    %527 = vst [vmem:[#allocation8 + $0x18] sm:$0xff] %v522
    // Predicated region
    $region42: #{decoder_forward_pallas.1} parent=1 // pred_check
      _
    $region43: #{decoder_forward_pallas.1} parent=1 // pred_check_branch
      %529 = sbr.rel (0) target = $region45
    $region44: #{decoder_forward_pallas.1} parent=1 // pred_region
      %s531 = ssub.s32 512, 512
      %532 = vsyncadd [#allocation4], %s531
      %s534 = sshll.u32 [#allocation8], 4
      %s535 = int_to_ptr.vmem [resolvable:$true] %s534
      %537 = dma.vmem_to_hbm [thread:$0]  %s535, 512, %s7, [#allocation4]
    $region45: #{decoder_forward_pallas.1} parent=1 // pred_fallthru
      _
    // Predicated region
    $region46: #{decoder_forward_pallas.1} parent=1 // pred_check
      _
    $region47: #{decoder_forward_pallas.1} parent=1 // pred_check_branch
      %539 = sbr.rel (0) target = $region49
    $region48: #{decoder_forward_pallas.1} parent=1 // pred_region
      %540 = dma.done [#allocation4], 512
    $region49: #{decoder_forward_pallas.1} parent=1 // pred_fallthru
      _
    %541 = vsyncpa [#allocation3], 1
    %542 = vsyncpa [#allocation6], 1
    %543 = vsyncpa [#allocation4], 1

</llo_original>
